<compile_context>
chip_gen: v7x
topology: tpu7x:2x2x1
jax: 0.10.0
libtpu: 0.0.40
codegen_flags: <defaults>
</compile_context>

<pallas_src>
import functools

import jax
import jax.numpy as jnp
from jax import lax
from jax.experimental import pallas as pl
from jax.experimental.pallas import tpu as pltpu

LANES = 128
SUBLANES = 8
MAX_TILE_ROWS = 8192  # 8192 x 128 f32 = 4 MiB per input per grid step


def _simmax_kernel(x_ref, w_ref, out_ref, *, margin, tile_rows, grid_k,
                   n_tiles, rem_valid, guarded):
    p = pl.program_id(0)  # partial-sum index ("parallel"; megacore on v7x)
    k = pl.program_id(1)  # row-tile index within this partial (reduction axis)

    @pl.when(k == 0)
    def _():
        out_ref[...] = jnp.zeros_like(out_ref)

    x = jnp.clip(x_ref[...].astype(jnp.float32), 0.0001, 0.9999)
    # Negation folded out of the kernel (applied once in the wrapper).
    v = jnp.log(x + margin) * w_ref[...].astype(jnp.float32)

    def fold(vv):
        # (tile_rows, 128) -> (8, 128) vreg-sized partial sum: pure VPU adds;
        # the single cross-lane reduction happens on the tiny result outside.
        return jnp.sum(vv.reshape(tile_rows // SUBLANES, SUBLANES, LANES),
                       axis=0)

    if not guarded:
        # Grid covers the data exactly: no masking, no duplicates.
        out_ref[...] += fold(v)
    else:
        t = p * grid_k + k        # logical tile index
        last = n_tiles - 1

        @pl.when(t < last)        # interior tiles: mask-free fast path
        def _():
            out_ref[...] += fold(v)

        @pl.when(t == last)       # single boundary tile: per-element mask
        def _():
            # Mask on the tile-local flat index; covers both the <1024-element
            # pad and any garbage in a partial boundary block (NaNs in the
            # discarded jnp.where branch are never selected).
            row = lax.broadcasted_iota(jnp.int32, v.shape, 0)
            lane = lax.broadcasted_iota(jnp.int32, v.shape, 1)
            valid = (row * LANES + lane) < rem_valid
            out_ref[...] += fold(jnp.where(valid, v, 0.0))

        # t > last: duplicate clamped re-read tile -> skip accumulation.


@functools.partial(jax.jit, static_argnames=("margin", "max_tile_rows"))
def simmax_loss(x, weights, margin=0.0, max_tile_rows=MAX_TILE_ROWS):
    assert x.shape == weights.shape
    n_elem = x.size

    # Feed native dtype (no wrapper-side astype pass); cast to f32 in-kernel.
    xf = x.reshape(-1)
    wf = weights.reshape(-1)

    # Pad only when the flat length is not a multiple of 8*128 (rare for NCHW
    # activations; the common case is a free reshape with zero extra HBM
    # traffic).  Padded elements are masked in-kernel on the boundary tile;
    # the pad values just keep every lane finite for any sensible margin.
    base = SUBLANES * LANES
    padded = -(-n_elem // base) * base
    if padded != n_elem:
        pad = padded - n_elem
        xf = jnp.pad(xf, (0, pad), constant_values=0.9999)
        wf = jnp.pad(wf, (0, pad), constant_values=0.0)

    rows = padded // LANES                          # multiple of 8
    tile_rows = min(int(max_tile_rows), rows)
    tile_rows = max(SUBLANES, (tile_rows // SUBLANES) * SUBLANES)
    n_tiles = -(-rows // tile_rows)

    # Split row tiles across partial sums so a v7x megacore can use both
    # TensorCores.  Prefer even splits: a duplicate grid slot costs one wasted
    # tile read on this bandwidth-bound kernel.
    num_partials = 1
    if n_tiles >= 2:
        cands = [c for c in (4, 2) if n_tiles >= c]

        def _waste(c):
            return c * (-(-n_tiles // c)) - n_tiles

        num_partials = min(cands, key=lambda c: (_waste(c), -c))
    grid_k = -(-n_tiles // num_partials)

    exact = (padded == n_elem
             and n_tiles * tile_rows == rows
             and num_partials * grid_k == n_tiles)
    # Tile-local flat index below which the boundary tile holds valid data.
    rem_valid = n_elem - (n_tiles - 1) * tile_rows * LANES

    x2 = xf.reshape(rows, LANES)
    w2 = wf.reshape(rows, LANES)

    def in_map(p, k):
        # Clamp so the DMA never targets a fully out-of-range block; such
        # duplicate tiles skip accumulation inside the kernel.
        return (jnp.minimum(p * grid_k + k, n_tiles - 1), 0)

    kernel = functools.partial(
        _simmax_kernel,
        margin=float(margin),
        tile_rows=tile_rows,
        grid_k=grid_k,
        n_tiles=n_tiles,
        rem_valid=rem_valid,
        guarded=not exact,
    )

    # 2 inputs x 2 pipeline buffers per tile; keep double buffering alive on
    # v5e (16 MiB scoped default) without crowding v7x's 64 MiB physical VMEM.
    in_bytes = tile_rows * LANES * (x2.dtype.itemsize + w2.dtype.itemsize)
    vmem_limit = int(min(48 * 1024 * 1024, max(32 * 1024 * 1024, 3 * in_bytes)))

    partials = pl.pallas_call(
        kernel,
        out_shape=jax.ShapeDtypeStruct((num_partials * SUBLANES, LANES),
                                       jnp.float32),
        grid_spec=pltpu.PrefetchScalarGridSpec(
            num_scalar_prefetch=0,
            grid=(num_partials, grid_k),
            in_specs=[
                pl.BlockSpec((tile_rows, LANES), in_map),
                pl.BlockSpec((tile_rows, LANES), in_map),
            ],
            out_specs=pl.BlockSpec((SUBLANES, LANES), lambda p, k: (p, 0)),
        ),
        compiler_params=pltpu.CompilerParams(
            dimension_semantics=("parallel", "arbitrary"),
            vmem_limit_bytes=vmem_limit,
        ),
        cost_estimate=pl.CostEstimate(
            flops=5 * n_elem,
            transcendentals=n_elem,
            bytes_accessed=int(x.size * x.dtype.itemsize
                               + weights.size * weights.dtype.itemsize
                               + num_partials * SUBLANES * LANES * 4),
        ),
    )(x2, w2)

    # Final tiny cross-lane reduction + mean + the folded-out negation
    # (at most 4 * 8 * 128 f32 values).
    return jnp.sum(partials) * (-1.0 / float(n_elem))


def simmax_loss_ref(x, weights, margin=0.0):
    xf = jnp.clip(x.astype(jnp.float32), 0.0001, 0.9999)
    return -jnp.mean(jnp.log(xf + margin) * weights.astype(jnp.float32))


if __name__ == "__main__":
    key = jax.random.PRNGKey(0)
    keys = jax.random.split(key, 8)

    def check(shape, margin, k, dtype=jnp.float32,
              max_tile_rows=MAX_TILE_ROWS, tol=1e-5):
        k1, k2 = jax.random.split(k)
        x = jax.random.uniform(k1, shape, dtype=jnp.float32).astype(dtype)
        w = jax.random.uniform(k2, shape, dtype=jnp.float32).astype(dtype)
        out = jax.block_until_ready(
            simmax_loss(x, w, margin=margin, max_tile_rows=max_tile_rows))
        ref = simmax_loss_ref(x, w, margin=margin)
        assert jnp.allclose(out, ref, rtol=tol, atol=tol), (
            shape, margin, out, ref)

    # primary small NCHW case (margin > 0 keeps log comfortably defined)
    check((2, 4, 16, 16), 0.5, keys[0])
    # default margin = 0 (clamp at 1e-4 keeps log finite, as in the reference)
    check((2, 4, 16, 16), 0.0, keys[1])
    # awkward size -> small pad + scalar-gated boundary-tile mask
    check((3, 5, 7, 11), 0.25, keys[2])
    # bf16 inputs fed natively (no wrapper astype), cast to f32 in-kernel
    check((2, 4, 16, 16), 0.5, keys[3], dtype=jnp.bfloat16, tol=1e-3)
    # partial boundary block + duplicate clamped re-read tile (skip path)
    check((2, 5, 32, 32), 0.1, keys[4], max_tile_rows=32)
    # larger case: single big tile, exact-cover fast path (no guards at all)
    check((4, 16, 128, 128), 0.1, keys[5])
    # larger case: multi-tile accumulation across 4 parallel partial sums
    check((4, 16, 128, 128), 0.1, keys[6], max_tile_rows=1024)
    # larger case with non-divisible tiling: boundary block exercised at scale
    check((4, 16, 128, 128), 0.1, keys[7], max_tile_rows=768)

    print("KERNEL_OK")
</pallas_src>

<mosaic_0001>
module attributes {stable_mosaic.version = 11 : i64} {
  func.func @_simmax_kernel(%arg0: i32, %arg1: i32, %arg2: memref<16x128xf32, #tpu.memory_space<vmem>>, %arg3: memref<16x128xf32, #tpu.memory_space<vmem>>, %arg4: memref<8x128xf32, #tpu.memory_space<vmem>>) attributes {dimension_semantics = [#tpu.dimension_semantics<parallel>, #tpu.dimension_semantics<arbitrary>], iteration_bounds = array<i64: 1, 1>, scalar_prefetch = 0 : i64, scratch_operands = 0 : i64, tpu.core_type = #tpu.core_type<tc>, window_params = [{transform_indices = @transform_0, window_bounds = array<i64: 16, 128>}, {transform_indices = @transform_1, window_bounds = array<i64: 16, 128>}, {transform_indices = @transform_2, window_bounds = array<i64: 8, 128>}]} {
    %c0_i32 = arith.constant 0 : i32
    %0 = arith.cmpi eq, %arg1, %c0_i32 : i32
    %1 = arith.extui %0 : i1 to i32
    %c0_i32_0 = arith.constant 0 : i32
    %2 = arith.cmpi ne, %1, %c0_i32_0 : i32
    scf.if %2 {
      %cst_11 = arith.constant 0.000000e+00 : f32
      %18 = vector.broadcast %cst_11 : f32 to vector<8x128xf32>
      %c0_12 = arith.constant 0 : index
      %c0_13 = arith.constant 0 : index
      %19 = vector.load %arg4[%c0_12, %c0_13] : memref<8x128xf32, #tpu.memory_space<vmem>>, vector<8x128xf32>
      tpu.vector_store %arg4[%c0_12, %c0_13], %18 {strides = array<i32>} : memref<8x128xf32, #tpu.memory_space<vmem>>, vector<8x128xf32>,
    } else {
    }
    %c0 = arith.constant 0 : index
    %c0_1 = arith.constant 0 : index
    %3 = vector.load %arg2[%c0, %c0_1] : memref<16x128xf32, #tpu.memory_space<vmem>>, vector<16x128xf32>
    %cst = arith.constant 9.99999974E-5 : f32
    %cst_2 = arith.constant 0.999899983 : f32
    %4 = vector.broadcast %cst : f32 to vector<16x128xf32>
    %5 = arith.maximumf %4, %3 : vector<16x128xf32>
    %6 = vector.broadcast %cst_2 : f32 to vector<16x128xf32>
    %7 = arith.minimumf %6, %5 : vector<16x128xf32>
    %cst_3 = arith.constant 5.000000e-01 : f32
    %8 = vector.broadcast %cst_3 : f32 to vector<16x128xf32>
    %9 = arith.addf %7, %8 : vector<16x128xf32>
    %10 = math.log %9 : vector<16x128xf32>
    %c0_4 = arith.constant 0 : index
    %c0_5 = arith.constant 0 : index
    %11 = vector.load %arg3[%c0_4, %c0_5] : memref<16x128xf32, #tpu.memory_space<vmem>>, vector<16x128xf32>
    %12 = arith.mulf %10, %11 : vector<16x128xf32>
    %c0_6 = arith.constant 0 : index
    %c0_7 = arith.constant 0 : index
    %13 = vector.load %arg4[%c0_6, %c0_7] : memref<8x128xf32, #tpu.memory_space<vmem>>, vector<8x128xf32>
    %14 = vector.shape_cast %12 : vector<16x128xf32> to vector<2x8x128xf32>
    %cst_8 = arith.constant dense<0.000000e+00> : vector<8x128xf32>
    %15 = vector.multi_reduction <add>, %14, %cst_8 [0] : vector<2x8x128xf32> to vector<8x128xf32>
    %16 = arith.addf %13, %15 : vector<8x128xf32>
    %c0_9 = arith.constant 0 : index
    %c0_10 = arith.constant 0 : index
    %17 = vector.load %arg4[%c0_9, %c0_10] : memref<8x128xf32, #tpu.memory_space<vmem>>, vector<8x128xf32>
    tpu.vector_store %arg4[%c0_9, %c0_10], %16 {strides = array<i32>} : memref<8x128xf32, #tpu.memory_space<vmem>>, vector<8x128xf32>,
    return
  }
  func.func @transform_0(%arg0: i32, %arg1: i32) -> (i32, i32) {
    %c1_i32 = arith.constant 1 : i32
    %0 = arith.muli %arg0, %c1_i32 : i32
    %1 = arith.addi %0, %arg1 : i32
    %c0_i32 = arith.constant 0 : i32
    %2 = arith.minsi %1, %c0_i32 : i32
    %c0_i32_0 = arith.constant 0 : i32
    %c0_i32_1 = arith.constant 0 : i32
    return %2, %c0_i32_0 : i32, i32
  }
  func.func @transform_1(%arg0: i32, %arg1: i32) -> (i32, i32) {
    %c1_i32 = arith.constant 1 : i32
    %0 = arith.muli %arg0, %c1_i32 : i32
    %1 = arith.addi %0, %arg1 : i32
    %c0_i32 = arith.constant 0 : i32
    %2 = arith.minsi %1, %c0_i32 : i32
    %c0_i32_0 = arith.constant 0 : i32
    %c0_i32_1 = arith.constant 0 : i32
    return %2, %c0_i32_0 : i32, i32
  }
  func.func @transform_2(%arg0: i32, %arg1: i32) -> (i32, i32) {
    %c0_i32 = arith.constant 0 : i32
    %c0_i32_0 = arith.constant 0 : i32
    return %arg0, %c0_i32 : i32, i32
  }
}

</mosaic_0001>

<llo_original>
// kernel: simmax_loss.1
$region0: #{simmax_loss.1}
  #allocation0 [shape = 'u32[]', space=smem, size = 0x4, offset = 0x4, fixed_abs, tag = 'smem constant byte address 0x4 - core index']
  #allocation1 [shape = 'u32[144,128]{1,0:T(1,128)}', space=vmem, size = 0x12000, scoped, tag = 'internal scratch']
  %s0 = inlined_call_operand.vmem [shape: f32[16,128], index: 0, kind: input, shape index: {}]
  %s1 = inlined_call_operand.vmem [shape: f32[16,128], index: 1, kind: input, shape index: {}]
  %s2 = inlined_call_operand.vmem [shape: f32[8,128], index: 2, kind: output, shape index: {}]
  %s3 = sld [smem:[#allocation0]]
  $region22: #{simmax_loss.1} parent=0
    _
  %s5 = ssub.s32 1, %s3
  %s6 = scalar_select 0, %s5, %s3
  // Predicated region
  $region2: #{simmax_loss.1} parent=0 // pred_check
    _
  $region3: #{simmax_loss.1} parent=0 // pred_check_branch
    %8 = sbr.rel (0) target = $region5
  $region4: #{simmax_loss.1} parent=0 // pred_region
    %s9 = sadd.s32 0, 0
    %p10 = scmp.lt.s32.totalorder %s9, 0
    %s11 = scalar_select %p10, %s9, 0
    %s12 = smul.u32 2, %s11
    %p13 = scmp.lt.s32.totalorder %s12, 1
    %s14 = scalar_select %p13, %s12, 1
    %s15 = smul.addr %s14, 8
    %s16 = scalar_lea.vmem %s0, %s15
    %s17 = sadd.s32 0, 0
    %p18 = scmp.lt.s32.totalorder %s17, 0
    %s19 = scalar_select %p18, %s17, 0
    %s20 = smul.u32 2, %s19
  $region5: #{simmax_loss.1} parent=0 // pred_fallthru
    _
  // Predicated region
  $region6: #{simmax_loss.1} parent=0 // pred_check
    _
  $region7: #{simmax_loss.1} parent=0 // pred_check_branch
    %22 = sbr.rel (0) target = $region9
  $region8: #{simmax_loss.1} parent=0 // pred_region
    %s23 = sadd.s32 0, 0
    %p24 = scmp.lt.s32.totalorder %s23, 0
    %s25 = scalar_select %p24, %s23, 0
    %s26 = smul.u32 2, %s25
    %p27 = scmp.lt.s32.totalorder %s26, 1
    %s28 = scalar_select %p27, %s26, 1
    %s29 = smul.addr %s28, 8
    %s30 = scalar_lea.vmem %s1, %s29
    %s31 = sadd.s32 0, 0
    %p32 = scmp.lt.s32.totalorder %s31, 0
    %s33 = scalar_select %p32, %s31, 0
    %s34 = smul.u32 2, %s33
  $region9: #{simmax_loss.1} parent=0 // pred_fallthru
    _
  %s35 = sadd.s32 0, 0
  %p36 = scmp.lt.s32.totalorder %s35, 0
  %s37 = scalar_select %p36, %s35, 0
  %s38 = smul.u32 2, %s37
  %p39 = scmp.lt.s32.totalorder %s38, 1
  %s40 = scalar_select %p39, %s38, 1
  %s41 = smul.addr %s40, 8
  %s42 = scalar_lea.vmem %s0, %s41
  %s43 = sadd.s32 0, 0
  %p44 = scmp.lt.s32.totalorder %s43, 0
  %s45 = scalar_select %p44, %s43, 0
  %s46 = smul.u32 2, %s45
  %p47 = scmp.lt.s32.totalorder %s46, 1
  %s48 = scalar_select %p47, %s46, 1
  %s49 = smul.addr %s48, 8
  %s50 = scalar_lea.vmem %s1, %s49
  %s51 = sadd.s32 0, 0
  %p52 = scmp.lt.s32.totalorder %s51, 0
  %s53 = scalar_select %p52, %s51, 0
  %s54 = smul.u32 2, %s53
  %p55 = scmp.lt.s32.totalorder %s54, 1
  %s56 = scalar_select %p55, %s54, 1
  %s57 = smul.addr %s56, 8
  %s58 = scalar_lea.vmem %s0, %s57
  %s59 = sadd.s32 0, 0
  %p60 = scmp.lt.s32.totalorder %s59, 0
  %s61 = scalar_select %p60, %s59, 0
  %s62 = smul.u32 2, %s61
  %s63 = sadd.s32 0, 0
  %p64 = scmp.lt.s32.totalorder %s63, 0
  %s65 = scalar_select %p64, %s63, 0
  %s66 = smul.u32 2, %s65
  %p67 = scmp.lt.s32.totalorder %s66, 1
  %s68 = scalar_select %p67, %s66, 1
  %s69 = smul.addr %s68, 8
  %s70 = scalar_lea.vmem %s1, %s69
  %s71 = sadd.s32 0, 0
  %p72 = scmp.lt.s32.totalorder %s71, 0
  %s73 = scalar_select %p72, %s71, 0
  %s74 = smul.u32 2, %s73
  %p75 = scmp.eq.s32.totalorder 0, 0
  // Predicated region
  $region10: #{simmax_loss.1} parent=0 // pred_check
    %p76 = pneg %p75
  $region11: #{simmax_loss.1} parent=0 // pred_check_branch
    %78 = sbr.rel (%p76) target = $region13
  $region12: #{simmax_loss.1} parent=0 // pred_region
    %79 = vst [vmem:[%s2] sm:$0xff] 0.0
  $region13: #{simmax_loss.1} parent=0 // pred_fallthru
    _
  %v80 = vld [vmem:[%s58] sm:$0xff]
  %v81 = vld [vmem:[%s58 + $0x8] sm:$0xff]
  %v82 = vmax.f32 %v80, 0.0001
  %v83 = vmax.f32 %v81, 0.0001
  %v84 = vmin.f32 %v82, 0.9999
  %v85 = vmin.f32 %v83, 0.9999
  %v86 = vadd.f32 %v84, 0.5
  %v87 = vadd.f32 %v85, 0.5
  %v88 = vlog2.pop %v86
  %v89 = vmul.f32 %v88, 0.6931472
  %v90 = vlog2.pop %v87
  %v91 = vmul.f32 %v90, 0.6931472
  %v92 = vld [vmem:[%s70] sm:$0xff]
  %v93 = vld [vmem:[%s70 + $0x8] sm:$0xff]
  %v94 = vmul.f32 %v89, %v92
  %v95 = vmul.f32 %v91, %v93
  %v96 = vld [vmem:[%s2] sm:$0xff]
  %v97 = vadd.f32 %v94, %v95
  %v98 = vadd.f32 %v96, %v97
  %99 = vst [vmem:[%s2] sm:$0xff] %v98
  // Predicated region
  $region14: #{simmax_loss.1} parent=0 // pred_check
    _
  $region15: #{simmax_loss.1} parent=0 // pred_check_branch
    %101 = sbr.rel (0) target = $region17
  $region16: #{simmax_loss.1} parent=0 // pred_region
    _
  $region17: #{simmax_loss.1} parent=0 // pred_fallthru
    _
  // Predicated region
  $region18: #{simmax_loss.1} parent=0 // pred_check
    _
  $region19: #{simmax_loss.1} parent=0 // pred_check_branch
    %103 = sbr.rel (0) target = $region21
  $region20: #{simmax_loss.1} parent=0 // pred_region
    _
  $region21: #{simmax_loss.1} parent=0 // pred_fallthru
    _

</llo_original>
